<compile_context>
chip_gen: v7x
topology: tpu7x:2x2x1
jax: 0.10.0
libtpu: 0.0.40
codegen_flags: <defaults>
</compile_context>

<pallas_src>
import functools

import jax
import jax.numpy as jnp
from jax import lax
from jax.experimental import pallas as pl
from jax.experimental.pallas import tpu as pltpu

_MIB = 1024 * 1024
_N_DMA_SLOTS = 8          # row copies kept in flight on the DMA-gather path


# ---------------------------------------------------------------------------
# Kernels
# ---------------------------------------------------------------------------
def _dma_gather_kernel(idx_ref, x_ref, o_ref, sem):
    """Row-gather via per-row HBM->VMEM DMAs (only kept rows are read).

    idx_ref: (B, K) int32 in SMEM (scalar-prefetched; cls folded in as 0).
    x_ref:   (B, N, D) in HBM (memory_space=pl.ANY).
    o_ref:   (bt, K, D) VMEM output block; row DMAs land directly in it.
    sem:     (_N_DMA_SLOTS,) DMA semaphores, used round-robin.
    """
    bt, K, _ = o_ref.shape
    B = x_ref.shape[0]
    base = pl.program_id(0) * bt
    total = bt * K

    def wait_slot(slot):
        # Same-shape descriptor; .wait() only uses the byte count + semaphore.
        pltpu.make_async_copy(x_ref.at[0, pl.ds(0, 1), :],
                              o_ref.at[0, pl.ds(0, 1), :],
                              sem.at[slot]).wait()

    @pl.loop(0, bt)
    def _(i):
        # Clamp the cdiv tail: duplicated rows land in the masked-out part of
        # the output block and are discarded on writeback.
        b = jnp.minimum(base + i, B - 1)

        @pl.loop(0, K)
        def _(k):
            t = i * K + k
            slot = t % _N_DMA_SLOTS

            @pl.when(t >= _N_DMA_SLOTS)
            def _():
                wait_slot(slot)          # free the slot before reusing it

            row = idx_ref[b, k]
            pltpu.make_async_copy(
                x_ref.at[b, pl.ds(row, 1), :],
                o_ref.at[i, pl.ds(k, 1), :],
                sem.at[slot]).start()

    # Drain the copies still outstanding.
    n_tail = min(_N_DMA_SLOTS, total)

    @pl.loop(total - n_tail, total)
    def _(t):
        wait_slot(t % _N_DMA_SLOTS)


def _dense_gather_kernel(idx_ref, x_ref, o_ref, *, precision):
    """One-hot MXU gather over a full (bt, N, D) block.

    idx_ref: (bt, K, 1) int32 gather indices (cls folded in as row 0).  K sits
             on sublanes: exactly the orientation the one-hot compare needs,
             so no in-kernel cross-lane relayout is required (the padded VMEM
             tile is accounted for in the host-side footprint estimate).
    x_ref:   (bt, N, D) input block.
    o_ref:   (bt, K, D) gathered output (single aligned full-block store).
    """
    bt, K, _ = idx_ref.shape
    N = x_ref.shape[1]
    col = lax.broadcasted_iota(jnp.int32, (bt, K, N), 2)
    onehot = (col == idx_ref[...]).astype(x_ref.dtype)        # exact 0/1 rows
    # gather-as-matmul: out[b, k, d] = x[b, idx[b, k], d]
    out = jnp.einsum("bkn,bnd->bkd", onehot, x_ref[...],
                     preferred_element_type=jnp.float32,
                     precision=precision)
    o_ref[...] = out.astype(o_ref.dtype)


# ---------------------------------------------------------------------------
# Host-side helpers
# ---------------------------------------------------------------------------
def _round_up(v, m):
    return (v + m - 1) // m * m


def _vmem_budget():
    """Generation-aware block budget / scoped-VMEM limit (v7x has 64 MiB)."""
    try:
        cap = int(pltpu.get_tpu_info().vmem_capacity_bytes)
    except Exception:                      # interpret mode / older runtimes
        cap = 64 * _MIB
    budget = max(8 * _MIB, min(cap // 3, 48 * _MIB))
    limit = max(32 * _MIB, min((cap * 3) // 4, 96 * _MIB))
    return budget, limit


def _pick_batch_tile(B, per_batch_bytes, budget_bytes):
    """Largest batch tile fitting the budget; prefer an even grid (>=2 steps)
    so both v7x TensorCores get balanced work.  Grid uses cdiv, so bt does
    not have to divide B (tail blocks are masked)."""
    bt = max(1, min(B, budget_bytes // max(1, per_batch_bytes)))
    if B > 1:
        steps = pl.cdiv(B, bt)
        if steps < 2 or steps % 2 != 0:
            steps = max(2, steps + (steps % 2))
            bt = pl.cdiv(B, steps)
    return bt


def _dense_vmem_per_batch(N, D, K, itemsize):
    x_blk = N * D * itemsize                    # input block
    out_blk = K * D * itemsize                  # output block
    idx_blk = _round_up(K, 8) * 128 * 4         # (K, 1) int32, lane/sublane padded
    blocks = 2 * (x_blk + out_blk + idx_blk)    # double-buffered by the pipeline
    onehot = K * N * (itemsize + 4)             # one-hot + iota/compare temporaries
    acc = K * D * 4                             # f32 matmul accumulator
    return blocks + onehot + acc


def _gather_dma(x, full_idx, k_out, budget, vmem_limit):
    B, N, D = x.shape
    itemsize = jnp.dtype(x.dtype).itemsize
    per_b = 2 * k_out * D * itemsize + 4 * 1024      # out block (double-buffered)
    bt = _pick_batch_tile(B, per_b, budget)
    grid = pl.cdiv(B, bt)
    return pl.pallas_call(
        _dma_gather_kernel,
        out_shape=jax.ShapeDtypeStruct((B, k_out, D), x.dtype),
        grid_spec=pltpu.PrefetchScalarGridSpec(
            num_scalar_prefetch=1,
            grid=(grid,),
            in_specs=[pl.BlockSpec(memory_space=pl.ANY)],     # x stays in HBM
            out_specs=pl.BlockSpec((bt, k_out, D), lambda b, idx: (b, 0, 0)),
            scratch_shapes=[pltpu.SemaphoreType.DMA((_N_DMA_SLOTS,))]),
        compiler_params=pltpu.CompilerParams(
            dimension_semantics=("parallel",),
            vmem_limit_bytes=vmem_limit),
    )(full_idx, x)


def _gather_dense(x, full_idx, k_out, budget, vmem_limit):
    B, N, D = x.shape
    itemsize = jnp.dtype(x.dtype).itemsize
    per_b = _dense_vmem_per_batch(N, D, k_out, itemsize)
    bt = _pick_batch_tile(B, per_b, budget)
    grid = pl.cdiv(B, bt)
    idx3 = full_idx[:, :, None]                               # (B, K, 1)
    precision = (lax.Precision.HIGHEST
                 if jnp.dtype(x.dtype) == jnp.float32 else None)
    kern = functools.partial(_dense_gather_kernel, precision=precision)
    return pl.pallas_call(
        kern,
        out_shape=jax.ShapeDtypeStruct((B, k_out, D), x.dtype),
        grid_spec=pltpu.PrefetchScalarGridSpec(
            num_scalar_prefetch=0,
            grid=(grid,),
            in_specs=[pl.BlockSpec((bt, k_out, 1), lambda b: (b, 0, 0)),
                      pl.BlockSpec((bt, N, D), lambda b: (b, 0, 0))],
            out_specs=pl.BlockSpec((bt, k_out, D), lambda b: (b, 0, 0))),
        compiler_params=pltpu.CompilerParams(
            dimension_semantics=("parallel",),
            vmem_limit_bytes=vmem_limit),
    )(idx3, x)


# ---------------------------------------------------------------------------
# Public wrapper (PatchDropout.forward equivalent)
# ---------------------------------------------------------------------------
def patch_dropout(x, key, prob, *, exclude_first_token=True, training=True,
                  return_indices=False, gather="auto"):
    """JAX/Pallas equivalent of PatchDropout.forward.

    `return_indices=True` mirrors the `os.getenv('RoPE') == '1'` branch.
    `gather` in {"auto", "dma", "dense"} selects the gather implementation.
    """
    if (not training) or prob == 0.0:
        return x

    B, N, D = x.shape
    offset = 1 if exclude_first_token else 0
    num_tokens = N - offset
    keep_prob = 1.0 - prob
    num_keep = max(1, int(num_tokens * keep_prob))

    # torch.randn(batch, num_tokens).topk(num_keep, dim=-1).indices
    rand = jax.random.normal(key, (B, num_tokens), dtype=jnp.float32)
    _, patch_indices_keep = lax.top_k(rand, num_keep)          # (B, K) int32
    patch_indices_keep = patch_indices_keep.astype(jnp.int32)

    # Fold the cls token into the gather as row 0.
    if offset:
        full_idx = jnp.concatenate(
            [jnp.zeros((B, 1), jnp.int32), patch_indices_keep + offset], axis=1)
    else:
        full_idx = patch_indices_keep
    k_out = offset + num_keep

    itemsize = jnp.dtype(x.dtype).itemsize
    row_bytes = D * itemsize
    budget, vmem_limit = _vmem_budget()

    if gather == "auto":
        # Row DMAs only pay off when the saved HBM read traffic beats the
        # per-descriptor overhead: sizeable rows and a real drop fraction.
        use_dma = (row_bytes >= 1024) and (k_out <= 0.75 * N)
    else:
        use_dma = (gather == "dma")

    if use_dma:
        out = _gather_dma(x, full_idx, k_out, budget, vmem_limit)
    else:
        out = _gather_dense(x, full_idx, k_out, budget, vmem_limit)

    if return_indices:
        return out, patch_indices_keep
    return out


# ---------------------------------------------------------------------------
# Self-test
# ---------------------------------------------------------------------------
if __name__ == "__main__":
    key = jax.random.PRNGKey(0)
    kx, kd = jax.random.split(key)

    B, Npatch, D = 2, 16, 128            # x: [B, 1 + Npatch, D] (cls + patches)
    x = jax.random.normal(kx, (B, 1 + Npatch, D), dtype=jnp.float32)

    def ref_gather(xv, idx, exclude_first):
        if exclude_first:
            return jnp.concatenate(
                [xv[:, :1],
                 jnp.take_along_axis(xv[:, 1:], idx[:, :, None], axis=1)],
                axis=1)
        return jnp.take_along_axis(xv, idx[:, :, None], axis=1)

    # 1) DMA-gather path, f32, exclude_first_token=True -> bit-exact rows.
    out_a, idx_a = patch_dropout(x, kd, prob=0.5, training=True,
                                 return_indices=True, gather="dma")
    out_a = jax.block_until_ready(out_a)
    assert out_a.shape == (B, 1 + Npatch // 2, D), out_a.shape
    assert bool(jnp.array_equal(out_a, ref_gather(x, idx_a, True))), "dma f32"

    # 2) Dense (one-hot MXU, HIGHEST precision) path, f32 -- same indices.
    out_b, idx_b = patch_dropout(x, kd, prob=0.5, training=True,
                                 return_indices=True, gather="dense")
    out_b = jax.block_until_ready(out_b)
    assert bool(jnp.allclose(out_b, ref_gather(x, idx_b, True))), "dense f32"

    # 3) exclude_first_token=False branch (no cls concat), DMA path.
    out_c, idx_c = patch_dropout(x, kd, prob=0.5, exclude_first_token=False,
                                 training=True, return_indices=True,
                                 gather="dma")
    out_c = jax.block_until_ready(out_c)
    assert bool(jnp.array_equal(
        out_c, jnp.take_along_axis(x, idx_c[:, :, None], axis=1))), "no-cls"

    # 4) bf16 input: both paths stay exact.
    xb = x.astype(jnp.bfloat16)
    out_d, idx_d = patch_dropout(xb, kd, prob=0.5, training=True,
                                 return_indices=True, gather="dma")
    out_e, idx_e = patch_dropout(xb, kd, prob=0.5, training=True,
                                 return_indices=True, gather="dense")
    jax.block_until_ready((out_d, out_e))
    assert bool(jnp.array_equal(out_d, ref_gather(xb, idx_d, True))), "dma bf16"
    assert bool(jnp.array_equal(out_e, ref_gather(xb, idx_e, True))), "dense bf16"

    # 5) Odd batch exercises the cdiv tail (clamped DMAs + masked writeback).
    x5 = jax.random.normal(kx, (3, 1 + Npatch, D), dtype=jnp.float32)
    out_f, idx_f = patch_dropout(x5, kd, prob=0.75, training=True,
                                 return_indices=True, gather="dma")
    out_g, idx_g = patch_dropout(x5, kd, prob=0.75, training=True,
                                 return_indices=True, gather="dense")
    jax.block_until_ready((out_f, out_g))
    assert bool(jnp.array_equal(out_f, ref_gather(x5, idx_f, True))), "tail dma"
    assert bool(jnp.allclose(out_g, ref_gather(x5, idx_g, True))), "tail dense"

    # 6) eval / prob == 0 path is identity (returns x like the torch module).
    out_eval = jax.block_until_ready(
        patch_dropout(x, kd, prob=0.5, training=False))
    assert bool(jnp.array_equal(out_eval, x))

    print("KERNEL_OK")
</pallas_src>

<mosaic_0001>
module attributes {stable_mosaic.version = 11 : i64} {
  func.func @_dma_gather_kernel(%arg0: i32, %arg1: memref<2x9xi32, #tpu.memory_space<smem>>, %arg2: memref<2x17x128xf32, #tpu.memory_space<any>>, %arg3: memref<1x9x128xf32, #tpu.memory_space<vmem>>, %arg4: memref<8x!tpu.dma_semaphore, #tpu.memory_space<semaphore_mem>>) attributes {dimension_semantics = [#tpu.dimension_semantics<parallel>], iteration_bounds = array<i64: 2>, scalar_prefetch = 1 : i64, scratch_operands = 1 : i64, tpu.core_type = #tpu.core_type<tc>, window_params = [{}, {transform_indices = @transform_1, window_bounds = array<i64: 1, 9, 128>}]} {
    %c1_i32 = arith.constant 1 : i32
    %0 = arith.muli %arg0, %c1_i32 : i32
    %c0_i32 = arith.constant 0 : i32
    %c1_i32_0 = arith.constant 1 : i32
    %1 = arith.muli %c0_i32, %c1_i32_0 : i32
    %c0_i32_1 = arith.constant 0 : i32
    %2 = arith.addi %c0_i32_1, %1 : i32
    %3 = arith.addi %0, %2 : i32
    %c1_i32_2 = arith.constant 1 : i32
    %4 = arith.minsi %3, %c1_i32_2 : i32
    %c0_i32_3 = arith.constant 0 : i32
    %c9_i32 = arith.constant 9 : i32
    %5 = arith.addi %c0_i32_3, %c9_i32 : i32
    %c1_i32_4 = arith.constant 1 : i32
    scf.for %arg5 = %c0_i32_3 to %5 step %c1_i32_4  : i32 {
      %c1_i32_10 = arith.constant 1 : i32
      %7 = arith.muli %arg5, %c1_i32_10 : i32
      %c0_i32_11 = arith.constant 0 : i32
      %8 = arith.addi %c0_i32_11, %7 : i32
      %c9_i32_12 = arith.constant 9 : i32
      %9 = arith.muli %2, %c9_i32_12 : i32
      %10 = arith.addi %9, %8 : i32
      %c8_i32_13 = arith.constant 8 : i32
      %c0_i32_14 = arith.constant 0 : i32
      %11 = arith.cmpi eq, %c8_i32_13, %c0_i32_14 : i32
      %c1_i32_15 = arith.constant 1 : i32
      %12 = arith.select %11, %c1_i32_15, %c8_i32_13 : i32
      %13 = arith.remsi %10, %12 : i32
      %c0_i32_16 = arith.constant 0 : i32
      %14 = arith.cmpi ne, %13, %c0_i32_16 : i32
      %c0_i32_17 = arith.constant 0 : i32
      %15 = arith.cmpi slt, %13, %c0_i32_17 : i32
      %c0_i32_18 = arith.constant 0 : i32
      %16 = arith.cmpi slt, %12, %c0_i32_18 : i32
      %17 = arith.xori %15, %16 : i1
      %18 = arith.andi %17, %14 : i1
      %19 = arith.addi %13, %12 : i32
      %20 = arith.select %18, %19, %13 : i32
      %c8_i32_19 = arith.constant 8 : i32
      %21 = arith.cmpi sge, %10, %c8_i32_19 : i32
      %22 = arith.extui %21 : i1 to i32
      %c0_i32_20 = arith.constant 0 : i32
      %23 = arith.cmpi ne, %22, %c0_i32_20 : i32
      scf.if %23 {
        %c0_i32_23 = arith.constant 0 : i32
        %c0_i32_24 = arith.constant 0 : i32
        %c0_i32_25 = arith.constant 0 : i32
        %c0_i32_26 = arith.constant 0 : i32
        %33 = tpu.memref_slice %arg2[%c0_i32_23, %c0_i32_25, %c0_i32_26] : memref<2x17x128xf32, #tpu.memory_space<any>> -> memref<1x1x128xf32, #tpu.memory_space<any>>
        %34 = tpu.memref_squeeze %33 : memref<1x1x128xf32, #tpu.memory_space<any>> -> memref<1x128xf32, #tpu.memory_space<any>>
        %c0_i32_27 = arith.constant 0 : i32
        %c0_i32_28 = arith.constant 0 : i32
        %35 = tpu.memref_slice %arg3[%c0_i32_24, %c0_i32_27, %c0_i32_28] : memref<1x9x128xf32, #tpu.memory_space<vmem>> -> memref<1x1x128xf32, #tpu.memory_space<vmem>>
        %36 = tpu.memref_squeeze %35 : memref<1x1x128xf32, #tpu.memory_space<vmem>> -> memref<1x128xf32, #tpu.memory_space<vmem>>
        %37 = tpu.memref_slice %arg4[%20] : memref<8x!tpu.dma_semaphore, #tpu.memory_space<semaphore_mem>> -> memref<1x!tpu.dma_semaphore, #tpu.memory_space<semaphore_mem>>
        %38 = tpu.memref_squeeze %37 : memref<1x!tpu.dma_semaphore, #tpu.memory_space<semaphore_mem>> -> memref<!tpu.dma_semaphore, #tpu.memory_space<semaphore_mem>>
        tpu.wait_dma2 semaphore(%38 : memref<!tpu.dma_semaphore, #tpu.memory_space<semaphore_mem>>) src(%34 : memref<1x128xf32, #tpu.memory_space<any>>) dst(%36 : memref<1x128xf32, #tpu.memory_space<vmem>>)
      } else {
      }
      %24 = arith.index_cast %4 : i32 to index
      %25 = arith.index_cast %8 : i32 to index
      %26 = memref.load %arg1[%24, %25] : memref<2x9xi32, #tpu.memory_space<smem>>
      %c0_i32_21 = arith.constant 0 : i32
      %27 = tpu.memref_slice %arg2[%4, %26, %c0_i32_21] : memref<2x17x128xf32, #tpu.memory_space<any>> -> memref<1x1x128xf32, #tpu.memory_space<any>>
      %28 = tpu.memref_squeeze %27 : memref<1x1x128xf32, #tpu.memory_space<any>> -> memref<1x128xf32, #tpu.memory_space<any>>
      %c0_i32_22 = arith.constant 0 : i32
      %29 = tpu.memref_slice %arg3[%2, %8, %c0_i32_22] : memref<1x9x128xf32, #tpu.memory_space<vmem>> -> memref<1x1x128xf32, #tpu.memory_space<vmem>>
      %30 = tpu.memref_squeeze %29 : memref<1x1x128xf32, #tpu.memory_space<vmem>> -> memref<1x128xf32, #tpu.memory_space<vmem>>
      %31 = tpu.memref_slice %arg4[%20] : memref<8x!tpu.dma_semaphore, #tpu.memory_space<semaphore_mem>> -> memref<1x!tpu.dma_semaphore, #tpu.memory_space<semaphore_mem>>
      %32 = tpu.memref_squeeze %31 : memref<1x!tpu.dma_semaphore, #tpu.memory_space<semaphore_mem>> -> memref<!tpu.dma_semaphore, #tpu.memory_space<semaphore_mem>>
      tpu.enqueue_dma source(%28 : memref<1x128xf32, #tpu.memory_space<any>>) target(%30 : memref<1x128xf32, #tpu.memory_space<vmem>>) target_semaphore(%32 : memref<!tpu.dma_semaphore, #tpu.memory_space<semaphore_mem>>)
    }
    %c9_i32_5 = arith.constant 9 : i32
    %c1_i32_6 = arith.constant 1 : i32
    %c0_i32_7 = arith.constant 0 : i32
    %c8_i32 = arith.constant 8 : i32
    %6 = arith.addi %c0_i32_7, %c8_i32 : i32
    %c1_i32_8 = arith.constant 1 : i32
    scf.for %arg5 = %c0_i32_7 to %6 step %c1_i32_8  : i32 {
      %c1_i32_10 = arith.constant 1 : i32
      %7 = arith.muli %arg5, %c1_i32_10 : i32
      %c1_i32_11 = arith.constant 1 : i32
      %8 = arith.addi %c1_i32_11, %7 : i32
      %c8_i32_12 = arith.constant 8 : i32
      %c0_i32_13 = arith.constant 0 : i32
      %9 = arith.cmpi eq, %c8_i32_12, %c0_i32_13 : i32
      %c1_i32_14 = arith.constant 1 : i32
      %10 = arith.select %9, %c1_i32_14, %c8_i32_12 : i32
      %11 = arith.remsi %8, %10 : i32
      %c0_i32_15 = arith.constant 0 : i32
      %12 = arith.cmpi ne, %11, %c0_i32_15 : i32
      %c0_i32_16 = arith.constant 0 : i32
      %13 = arith.cmpi slt, %11, %c0_i32_16 : i32
      %c0_i32_17 = arith.constant 0 : i32
      %14 = arith.cmpi slt, %10, %c0_i32_17 : i32
      %15 = arith.xori %13, %14 : i1
      %16 = arith.andi %15, %12 : i1
      %17 = arith.addi %11, %10 : i32
      %18 = arith.select %16, %17, %11 : i32
      %c0_i32_18 = arith.constant 0 : i32
      %c0_i32_19 = arith.constant 0 : i32
      %c0_i32_20 = arith.constant 0 : i32
      %c0_i32_21 = arith.constant 0 : i32
      %19 = tpu.memref_slice %arg2[%c0_i32_18, %c0_i32_20, %c0_i32_21] : memref<2x17x128xf32, #tpu.memory_space<any>> -> memref<1x1x128xf32, #tpu.memory_space<any>>
      %20 = tpu.memref_squeeze %19 : memref<1x1x128xf32, #tpu.memory_space<any>> -> memref<1x128xf32, #tpu.memory_space<any>>
      %c0_i32_22 = arith.constant 0 : i32
      %c0_i32_23 = arith.constant 0 : i32
      %21 = tpu.memref_slice %arg3[%c0_i32_19, %c0_i32_22, %c0_i32_23] : memref<1x9x128xf32, #tpu.memory_space<vmem>> -> memref<1x1x128xf32, #tpu.memory_space<vmem>>
      %22 = tpu.memref_squeeze %21 : memref<1x1x128xf32, #tpu.memory_space<vmem>> -> memref<1x128xf32, #tpu.memory_space<vmem>>
      %23 = tpu.memref_slice %arg4[%18] : memref<8x!tpu.dma_semaphore, #tpu.memory_space<semaphore_mem>> -> memref<1x!tpu.dma_semaphore, #tpu.memory_space<semaphore_mem>>
      %24 = tpu.memref_squeeze %23 : memref<1x!tpu.dma_semaphore, #tpu.memory_space<semaphore_mem>> -> memref<!tpu.dma_semaphore, #tpu.memory_space<semaphore_mem>>
      tpu.wait_dma2 semaphore(%24 : memref<!tpu.dma_semaphore, #tpu.memory_space<semaphore_mem>>) src(%20 : memref<1x128xf32, #tpu.memory_space<any>>) dst(%22 : memref<1x128xf32, #tpu.memory_space<vmem>>)
    }
    %c8_i32_9 = arith.constant 8 : i32
    return
  }
  func.func @transform_1(%arg0: i32, %arg1: memref<2x9xi32, #tpu.memory_space<smem>>) -> (i32, i32, i32) {
    %c0_i32 = arith.constant 0 : i32
    %c0_i32_0 = arith.constant 0 : i32
    %c0_i32_1 = arith.constant 0 : i32
    return %arg0, %c0_i32, %c0_i32_0 : i32, i32, i32
  }
}

</mosaic_0001>

<llo_original>
// kernel: tpu_custom_call.1
$region0: #{tpu_custom_call.1}
  #allocation0 [shape = 'u32[]', space=smem, size = 0x4, offset = 0x4, fixed_abs, tag = 'smem constant byte address 0x4 - core index']
  #allocation1 [shape = 'u32[144,128]{1,0:T(1,128)}', space=vmem, size = 0x12000, scoped, tag = 'internal scratch']
  #allocation2 [shape = 's32[8]{0}', space=sflag, size = 0x20, scoped, tag = 'scratch operand']
  #allocation3 [shape = 's32[1]{0}', space=sflag, size = 0x4, scoped, tag = 'scoped memory for tpu_custom_call.1']
  #allocation4 [shape = 'u8[1024]{0}', space=smem, size = 0x400, scoped, tag = 'prefetched SMEM operand 0']
  #allocation5 [shape = 's32[]', space=sflag, size = 0x4, offset = 0, fixed_abs, tag = 'sflag constant byte address 0x0 - dummy sync flag']
  %s0 = inlined_call_operand.vmem [shape: s32[2,9], index: 0, kind: input, shape index: {}]
  %s1 = inlined_call_operand.vmem [shape: f32[2,17,128], index: 1, kind: input, shape index: {}]
  %s2 = inlined_call_operand.vmem [shape: f32[2,9,128], index: 2, kind: output, shape index: {}]
  %s3 = sld [smem:[#allocation0]]
  $region73: #{tpu_custom_call.1} parent=0
    _
  %s5 = ssub.s32 1, %s3
  %s6 = scalar_select 0, %s5, %s3
  %s7 = sshll.u32 %s0, 4
  %s8 = int_to_ptr.vmem [resolvable:$true] %s7
  %10 = dma.vmem_to_smem %s8, 32, [#allocation4], [#allocation3]
  %11 = dma.done [#allocation3], 32
  %12 = sfence
  loop: start=0, step=1, limit=3
  $region2: #{tpu_custom_call.1} parent=0 // loop_pre_header
    _
  $region3: #{tpu_custom_call.1} parent=0 // loop_header
    %s14 = sphi 0, %s18
    %p15 = scmp.ge.s32.totalorder %s14, 3
    %s23 = sphi 0, %s25
    %s26 = sphi 0, %s23
    %s36 = sphi 0, %s26
  $region4: #{tpu_custom_call.1} parent=0 // loop_header_branch
    %17 = sbr.rel (%p15) target = $region8
  $region5: #{tpu_custom_call.1} parent=0 // loop_body
    %s19 = ssub.s32 %s14, 1
    %s20 = sadd.s32 %s14, 1
    %s21 = ssub.s32 %s14, %s20
    %p22 = scmp.eq.s32.totalorder %s21, 0
    %s24 = sadd.s32 %s23, 1
    %s25 = scalar_select %p22, %s23, %s24
    %p27 = pneg %p22
    %p28 = scmp.eq.s32.totalorder %s14, 1
    %p29 = por %p27, %p28
    %p30 = scmp.ne.s32.totalorder %s23, %s26
    %p31 = scmp.eq.s32.totalorder %s14, 0
    %p32 = por %p30, %p31
    %p33 = scmp.ne.s32.totalorder %s23, %s26
    %p34 = scmp.eq.s32.totalorder %s19, 1
    %p35 = por %p33, %p34
    %p37 = scmp.ne.s32.totalorder %s26, %s36
    %p38 = scmp.eq.s32.totalorder %s19, 0
    %p39 = por %p37, %p38
    %p40 = scmp.lt.s32.totalorder %s14, 2
    // Predicated region
    $region9: #{tpu_custom_call.1} parent=5 // pred_check
      %p41 = pneg %p40
    $region10: #{tpu_custom_call.1} parent=5 // pred_check_branch
      %43 = sbr.rel (%p41) target = $region12
    $region11: #{tpu_custom_call.1} parent=5 // pred_region
      %p44 = pneg %p32
      %p45 = pneg %p29
      %p46 = scmp.lt.s32.totalorder %s14, 1
      %s47 = scalar_select %p46, %s14, 1
      %s48 = smul.addr %s47, 2
      %s49 = smul.addr %s48, 8
      %s50 = scalar_lea.vmem %s2, %s49
      %p51 = scmp.lt.s32.totalorder %s14, 1
      %s52 = scalar_select %p51, %s14, 1
      %s53 = smul.addr %s52, 2
      %s54 = smul.addr %s53, 8
      %s55 = scalar_lea.vmem %s2, %s54
      %p56 = scmp.lt.s32.totalorder %s14, 1
      %s57 = scalar_select %p56, %s14, 1
      loop: start=0, step=1, limit=9
      $region13: #{tpu_custom_call.1} parent=11 // loop_pre_header
        _
      $region14: #{tpu_custom_call.1} parent=11 // loop_header
        %s59 = sphi 0, %s63
        %p60 = scmp.ge.s32.totalorder %s59, 9
      $region15: #{tpu_custom_call.1} parent=11 // loop_header_branch
        %62 = sbr.rel (%p60) target = $region19
      $region16: #{tpu_custom_call.1} parent=11 // loop_body
        %p64 = scmp.lt.s32.totalorder %s59, 0
        %s65 = ssub.s32 0, %s59
        %s66 = scalar_select %p64, %s65, %s59
        %s67 = sand.u32 %s66, 7
        %s68 = ssub.s32 0, %s67
        %s69 = scalar_select %p64, %s68, %s67
        %p70 = scmp.ne.s32.totalorder %s69, 0
        %p71 = scmp.lt.s32.totalorder %s69, 0
        %p72 = pnand %p71, %p70
        %p73 = pneg %p72
        %s74 = sadd.s32 %s69, 8
        %s75 = scalar_select %p73, %s74, %s69
        %p76 = scmp.ge.s32.totalorder %s59, 8
        // Predicated region
        $region20: #{tpu_custom_call.1} parent=16 // pred_check
          %p77 = pneg %p76
        $region21: #{tpu_custom_call.1} parent=16 // pred_check_branch
          %79 = sbr.rel (%p77) target = $region23
        $region22: #{tpu_custom_call.1} parent=16 // pred_region
          %s80 = scalar_lea.sflag [#allocation2], %s75
          %s81 = smul.u32 1, 1
          %s82 = sshll.u32 %s81, 4
          %83 = dma.done %s80, %s82
        $region23: #{tpu_custom_call.1} parent=16 // pred_fallthru
          _
        %s84 = sshra.s32 %s59, 7
        %s85 = sand.u32 %s59, 127
        %s86 = sadd.s32 %s84, %s57
        %s87 = smul.u32 %s86, 128
        %s88 = sshra.s32 %s59, 7
        %s89 = sand.u32 %s59, 127
        %s90 = sadd.s32 %s87, %s89
        %s91 = sld [smem:[#allocation4 + %s90]]
        %s92 = smul.u32 %s57, 24
        %s93 = sadd.s32 %s91, %s92
        %s94 = scalar_lea.vmem %s1, %s93
        %s95 = scalar_lea.vmem %s55, %s59
        %s96 = scalar_lea.sflag [#allocation2], %s75
        %p98 = scmp.lt.u32.totalorder 1, 8
        %p99 = pneg %p98
        // Predicated region
        $region24: #{tpu_custom_call.1} parent=16 // pred_check
          _
        $region25: #{tpu_custom_call.1} parent=16 // pred_check_branch
          %101 = sbr.rel (%p98) target = $region27
        $region26: #{tpu_custom_call.1} parent=16 // pred_region
          %s116 = sand.u32 1, 7
          %p117 = scmp.eq.s32.totalorder %s116, 0
          %p118 = pneg %p117
          // Predicated region
          $region39: #{tpu_custom_call.1} parent=26 // pred_check
            _
          $region40: #{tpu_custom_call.1} parent=26 // pred_check_branch
            %120 = sbr.rel (%p117) target = $region42
          $region41: #{tpu_custom_call.1} parent=26 // pred_region
            %s121 = sand.u32 1, 7
            %s122 = ssub.s32 1, %s121
            %s123 = scalar_lea.vmem %s94, %s122
            %s124 = ssub.s32 1, %s121
            %s125 = scalar_lea.vmem %s95, %s124
            %s126 = sshllo.u32 0, %s121
            loop: start=0, step=1, limit=1
            $region43: #{tpu_custom_call.1} parent=41 // loop_pre_header
              _
            $region44: #{tpu_custom_call.1} parent=41 // loop_header
              %s128 = sphi 0, %s132
              %p129 = scmp.ge.s32.totalorder %s128, 1
              %s133 = sphi %s123, %s123
              %s134 = sphi %s125, %s125
            $region45: #{tpu_custom_call.1} parent=41 // loop_header_branch
              %131 = sbr.rel (%p129) target = $region49
            $region46: #{tpu_custom_call.1} parent=41 // loop_body
              %v135 = vld [vmem:[%s133] sm:%s126]
              %136 = vst [vmem:[%s134] sm:%s126] %v135
            $region47: #{tpu_custom_call.1} parent=41 // loop_footer
              %s132 = sadd.s32 1, %s128
            $region48: #{tpu_custom_call.1} parent=41 // loop_footer_branch
              %127 = sbr.rel target = $region44
            $region49: #{tpu_custom_call.1} parent=41 // loop_exit
              _
          $region42: #{tpu_custom_call.1} parent=26 // pred_fallthru
            _
        $region27: #{tpu_custom_call.1} parent=16 // pred_fallthru
          _
        // Predicated region
        $region28: #{tpu_custom_call.1} parent=16 // pred_check
          %p102 = pneg %p98
        $region29: #{tpu_custom_call.1} parent=16 // pred_check_branch
          %104 = sbr.rel (%p102) target = $region31
        $region30: #{tpu_custom_call.1} parent=16 // pred_region
          %s105 = sshllo.u32 0, 1
          loop: start=0, step=1, limit=1
          $region32: #{tpu_custom_call.1} parent=30 // loop_pre_header
            _
          $region33: #{tpu_custom_call.1} parent=30 // loop_header
            %s107 = sphi 0, %s111
            %p108 = scmp.ge.s32.totalorder %s107, 1
            %s112 = sphi %s94, %s94
            %s113 = sphi %s95, %s95
          $region34: #{tpu_custom_call.1} parent=30 // loop_header_branch
            %110 = sbr.rel (%p108) target = $region38
          $region35: #{tpu_custom_call.1} parent=30 // loop_body
            %v114 = vld [vmem:[%s112] sm:%s105]
            %115 = vst [vmem:[%s113] sm:%s105] %v114
          $region36: #{tpu_custom_call.1} parent=30 // loop_footer
            %s111 = sadd.s32 1, %s107
          $region37: #{tpu_custom_call.1} parent=30 // loop_footer_branch
            %106 = sbr.rel target = $region33
          $region38: #{tpu_custom_call.1} parent=30 // loop_exit
            _
        $region31: #{tpu_custom_call.1} parent=16 // pred_fallthru
          _
        // Predicated region
        $region50: #{tpu_custom_call.1} parent=16 // pred_check
          _
        $region51: #{tpu_custom_call.1} parent=16 // pred_check_branch
          %139 = sbr.rel (0) target = $region53
        $region52: #{tpu_custom_call.1} parent=16 // pred_region
          %140 = vsyncadd %s96, 16
        $region53: #{tpu_custom_call.1} parent=16 // pred_fallthru
          _
      $region17: #{tpu_custom_call.1} parent=11 // loop_footer
        %s63 = sadd.s32 1, %s59
      $region18: #{tpu_custom_call.1} parent=11 // loop_footer_branch
        %58 = sbr.rel target = $region14
      $region19: #{tpu_custom_call.1} parent=11 // loop_exit
        _
      loop: start=0, step=1, limit=8
      $region54: #{tpu_custom_call.1} parent=11 // loop_pre_header
        _
      $region55: #{tpu_custom_call.1} parent=11 // loop_header
        %s142 = sphi 0, %s146
        %p143 = scmp.ge.s32.totalorder %s142, 8
      $region56: #{tpu_custom_call.1} parent=11 // loop_header_branch
        %145 = sbr.rel (%p143) target = $region60
      $region57: #{tpu_custom_call.1} parent=11 // loop_body
        %s147 = sadd.s32 %s142, 1
        %p148 = scmp.lt.s32.totalorder %s147, 0
        %s149 = ssub.s32 0, %s147
        %s150 = scalar_select %p148, %s149, %s147
        %s151 = sand.u32 %s150, 7
        %s152 = ssub.s32 0, %s151
        %s153 = scalar_select %p148, %s152, %s151
        %p154 = scmp.ne.s32.totalorder %s153, 0
        %p155 = scmp.lt.s32.totalorder %s153, 0
        %p156 = pnand %p155, %p154
        %p157 = pneg %p156
        %s158 = sadd.s32 %s153, 8
        %s159 = scalar_select %p157, %s158, %s153
        %s160 = scalar_lea.sflag [#allocation2], %s159
        %s161 = smul.u32 1, 1
        %s162 = sshll.u32 %s161, 4
        %163 = dma.done %s160, %s162
      $region58: #{tpu_custom_call.1} parent=11 // loop_footer
        %s146 = sadd.s32 1, %s142
      $region59: #{tpu_custom_call.1} parent=11 // loop_footer_branch
        %141 = sbr.rel target = $region55
      $region60: #{tpu_custom_call.1} parent=11 // loop_exit
        _
      %p164 = scmp.lt.s32.totalorder %s14, 1
      %s165 = scalar_select %p164, %s14, 1
      %s166 = smul.addr %s165, 2
      %s167 = smul.addr %s166, 8
      %s168 = scalar_lea.vmem %s2, %s167
      // Predicated region
      $region61: #{tpu_custom_call.1} parent=11 // pred_check
        %p169 = pneg %p29
      $region62: #{tpu_custom_call.1} parent=11 // pred_check_branch
        %171 = sbr.rel (%p169) target = $region64
      $region63: #{tpu_custom_call.1} parent=11 // pred_region
        _
      $region64: #{tpu_custom_call.1} parent=11 // pred_fallthru
        _
    $region12: #{tpu_custom_call.1} parent=5 // pred_fallthru
      _
    %p172 = scmp.le.s32.totalorder 1, %s14
    // Predicated region
    $region65: #{tpu_custom_call.1} parent=5 // pred_check
      %p173 = pneg %p172
    $region66: #{tpu_custom_call.1} parent=5 // pred_check_branch
      %175 = sbr.rel (%p173) target = $region68
    $region67: #{tpu_custom_call.1} parent=5 // pred_region
      %s176 = ssub.s32 %s14, 1
      // Predicated region
      $region69: #{tpu_custom_call.1} parent=67 // pred_check
        %p177 = pneg %p35
      $region70: #{tpu_custom_call.1} parent=67 // pred_check_branch
        %179 = sbr.rel (%p177) target = $region72
      $region71: #{tpu_custom_call.1} parent=67 // pred_region
        %p180 = scmp.lt.s32.totalorder %s19, 1
        %s181 = scalar_select %p180, %s19, 1
        %s182 = smul.addr %s181, 2
        %s183 = smul.addr %s182, 8
        %s184 = scalar_lea.vmem %s2, %s183
      $region72: #{tpu_custom_call.1} parent=67 // pred_fallthru
        _
    $region68: #{tpu_custom_call.1} parent=5 // pred_fallthru
      _
  $region6: #{tpu_custom_call.1} parent=0 // loop_footer
    %s18 = sadd.s32 1, %s14
  $region7: #{tpu_custom_call.1} parent=0 // loop_footer_branch
    %13 = sbr.rel target = $region3
  $region8: #{tpu_custom_call.1} parent=0 // loop_exit
    _
  %185 = vsyncmov [#allocation2]
  %s186 = vpop.sfrf %185
  %p187 = scmp.eq.s32.totalorder %s186, 0
  %p188 = pneg %p187
  %190 = shalt.err (%p188)
  %s191 = scalar_lea.sflag [#allocation2], 1
  %192 = vsyncmov %s191
  %s193 = vpop.sfrf %192
  %p194 = scmp.eq.s32.totalorder %s193, 0
  %p195 = pneg %p194
  %197 = shalt.err (%p195)
  %s198 = scalar_lea.sflag [#allocation2], 2
  %199 = vsyncmov %s198
  %s200 = vpop.sfrf %199
  %p201 = scmp.eq.s32.totalorder %s200, 0
  %p202 = pneg %p201
  %204 = shalt.err (%p202)
  %s205 = scalar_lea.sflag [#allocation2], 3
  %206 = vsyncmov %s205
  %s207 = vpop.sfrf %206
  %p208 = scmp.eq.s32.totalorder %s207, 0
  %p209 = pneg %p208
  %211 = shalt.err (%p209)
  %s212 = scalar_lea.sflag [#allocation2], 4
  %213 = vsyncmov %s212
  %s214 = vpop.sfrf %213
  %p215 = scmp.eq.s32.totalorder %s214, 0
  %p216 = pneg %p215
  %218 = shalt.err (%p216)
  %s219 = scalar_lea.sflag [#allocation2], 5
  %220 = vsyncmov %s219
  %s221 = vpop.sfrf %220
  %p222 = scmp.eq.s32.totalorder %s221, 0
  %p223 = pneg %p222
  %225 = shalt.err (%p223)
  %s226 = scalar_lea.sflag [#allocation2], 6
  %227 = vsyncmov %s226
  %s228 = vpop.sfrf %227
  %p229 = scmp.eq.s32.totalorder %s228, 0
  %p230 = pneg %p229
  %232 = shalt.err (%p230)
  %s233 = scalar_lea.sflag [#allocation2], 7
  %234 = vsyncmov %s233
  %s235 = vpop.sfrf %234
  %p236 = scmp.eq.s32.totalorder %s235, 0
  %p237 = pneg %p236
  %239 = shalt.err (%p237)

</llo_original>
